<compile_context>
chip_gen: v7x
topology: tpu7x:2x2x1
jax: 0.10.0
libtpu: 0.0.40
codegen_flags: <defaults>
</compile_context>

<pallas_src>
import math

import jax
import jax.numpy as jnp
from jax.experimental import pallas as pl
from jax.experimental.pallas import tpu as pltpu


def _ffn_accumulate(x_ref, w1_ref, b1_ref, w2_ref, b2_ref, acc_ref):
    """One (i, k) grid step: acc += relu(x @ w1[:, k] + b1[k]) @ w2[k, :]."""
    k = pl.program_id(1)

    @pl.when(k == 0)
    def _init():
        # Hoist the second-layer bias into the accumulator initialization.
        acc_ref[...] = jnp.broadcast_to(b2_ref[...], acc_ref.shape)

    cd = w1_ref.dtype
    # Linear1 slice: (tm, hidden) @ (hidden, tk) -> (tm, tk), f32 accumulation.
    h = jnp.dot(x_ref[...].astype(cd), w1_ref[...],
                preferred_element_type=jnp.float32)
    h = jnp.maximum(h + b1_ref[...], 0.0)  # bias + ReLU (f32, VPU)
    # TODO(synk): training-mode dropout would mask h via pltpu.prng_random_bits;
    # eval-mode nn.Dropout is identity, so nothing to do here.

    # Linear2 partial product over this 2H tile, accumulated in f32.
    acc_ref[...] += jnp.dot(h.astype(cd), w2_ref[...],
                            preferred_element_type=jnp.float32)


def ffn_kernel_inplace(x_ref, w1_ref, b1_ref, w2_ref, b2_ref, o_ref):
    # f32 output: accumulate directly into the resident output block (no scratch).
    _ffn_accumulate(x_ref, w1_ref, b1_ref, w2_ref, b2_ref, o_ref)


def ffn_kernel_scratch(x_ref, w1_ref, b1_ref, w2_ref, b2_ref, o_ref, acc_ref):
    # Non-f32 output: accumulate in f32 scratch, cast/store once at the end.
    _ffn_accumulate(x_ref, w1_ref, b1_ref, w2_ref, b2_ref, acc_ref)

    @pl.when(pl.program_id(1) == pl.num_programs(1) - 1)
    def _finalize():
        o_ref[...] = acc_ref[...].astype(o_ref.dtype)


def _round_up(x, m):
    return ((x + m - 1) // m) * m


def _pick_k_tile(two_h):
    for cand in (512, 256, 128):
        if two_h % cand == 0:
            return cand
    # Only reachable when 2H < 128 (prepare_ffn_params lane-aligns larger 2H);
    # a full-extent block is legal per the (8, 128) BlockSpec rule.
    return two_h


def _pick_m_tile(M, tm_req):
    tm = _round_up(min(tm_req, M), 8)
    if tm >= M:
        if M > 8:
            # Split into >=2 tiles so the "parallel" M axis can span both
            # TensorCores on v7x.
            tm = _round_up(-(-M // 2), 8)
        else:
            tm = M  # single full-extent block
    return tm


def _vmem_capacity_bytes():
    try:
        return int(pltpu.get_tpu_info().vmem_capacity_bytes)
    except Exception:
        return 64 * 1024 * 1024  # conservative fallback (v7x-sized VMEM)


def prepare_ffn_params(w1_t, b1, w2_t, b2, *, compute_dtype=jnp.bfloat16):
    """One-time parameter prep (do NOT call per forward pass).

    - Casts both weight matrices to the MXU compute dtype (bf16 by default).
    - Pads the 2H dimension to a multiple of 128 (zero padding is exact:
      relu(0 + 0) = 0 times zero rows of w2 contributes nothing), so a fixed
      lane-aligned K tile always divides it.
    - Biases stay in f32 and are reshaped to (1, N) once.

    w1_t: (hidden, 2H), w2_t: (2H, outdim) -- torch weights stored transposed.
    """
    hidden, two_h = w1_t.shape
    outdim = w2_t.shape[1]
    assert w2_t.shape[0] == two_h and b1.shape == (two_h,) and b2.shape == (outdim,)
    if two_h > 128 and two_h % 128 != 0:
        pad = _round_up(two_h, 128) - two_h
        w1_t = jnp.pad(w1_t, ((0, 0), (0, pad)))
        b1 = jnp.pad(b1, (0, pad))
        w2_t = jnp.pad(w2_t, ((0, pad), (0, 0)))
    return (w1_t.astype(compute_dtype),
            b1.reshape(1, -1).astype(jnp.float32),
            w2_t.astype(compute_dtype),
            b2.reshape(1, -1).astype(jnp.float32))


def position_wise_ffn(x, w1_t, b1_2d, w2_t, b2_2d, *, tm=None, tk=None):
    """Fused FFN forward. x: (..., hidden); params from prepare_ffn_params."""
    orig_shape = x.shape
    out_dtype = x.dtype
    hidden = orig_shape[-1]
    two_h = w1_t.shape[1]
    outdim = w2_t.shape[1]
    assert w1_t.shape[0] == hidden and w2_t.shape[0] == two_h
    assert b1_2d.shape == (1, two_h) and b2_2d.shape == (1, outdim)

    x2d = x.reshape(-1, hidden)
    M = x2d.shape[0]

    vmem_cap = _vmem_capacity_bytes()
    # ~96 MiB on 128-MiB chips (v5e/v6e), ~48 MiB on 64-MiB v7x.
    vmem_limit = min((vmem_cap * 3) // 4, 112 * 1024 * 1024)

    if tk is None:
        tk = _pick_k_tile(two_h)
    assert two_h % tk == 0
    k_tiles = two_h // tk

    if tm is None:
        # Big M tiles on 128-MiB-VMEM chips to amortize weight re-streaming;
        # smaller on 64-MiB v7x (its 3.2 TB/s HBM tolerates the re-streaming).
        tm = 1024 if vmem_cap > (96 << 20) else (512 if vmem_cap > (64 << 20) else 256)
    tm = _pick_m_tile(M, tm)

    # Shrink tm if the double-buffered working set would overflow the budget.
    cd_bytes = jnp.dtype(w1_t.dtype).itemsize
    x_bytes = jnp.dtype(x2d.dtype).itemsize
    out_bytes = jnp.dtype(out_dtype).itemsize

    def _working_set(tm_):
        ws = 2 * (tm_ * hidden * x_bytes        # x tile (double-buffered)
                  + hidden * tk * cd_bytes      # w1 tile
                  + tk * outdim * cd_bytes      # w2 tile
                  + (tk + outdim) * 4           # biases
                  + tm_ * outdim * out_bytes)   # output tile
        ws += tm_ * outdim * 4                  # f32 accumulator
        return ws

    while tm > 64 and _working_set(tm) > int(0.8 * vmem_limit):
        tm = max(64, _round_up(tm // 2, 8))

    m_tiles = pl.cdiv(M, tm)

    if out_dtype == jnp.float32:
        kernel = ffn_kernel_inplace
        scratch_shapes = []
    else:
        kernel = ffn_kernel_scratch
        scratch_shapes = [pltpu.VMEM((tm, outdim), jnp.float32)]

    flops = 2 * M * hidden * two_h + 2 * M * two_h * outdim
    weight_bytes = (w1_t.size * cd_bytes + w2_t.size * cd_bytes
                    + (b1_2d.size + b2_2d.size) * 4)
    bytes_accessed = (x2d.size * x_bytes
                      + m_tiles * weight_bytes   # weights re-streamed per M tile
                      + M * outdim * out_bytes)

    out = pl.pallas_call(
        kernel,
        out_shape=jax.ShapeDtypeStruct((M, outdim), out_dtype),
        grid_spec=pltpu.PrefetchScalarGridSpec(
            num_scalar_prefetch=0,
            grid=(m_tiles, k_tiles),                 # reduction axis last
            in_specs=[
                pl.BlockSpec((tm, hidden), lambda i, k: (i, 0)),
                pl.BlockSpec((hidden, tk), lambda i, k: (0, k)),
                pl.BlockSpec((1, tk), lambda i, k: (0, k)),
                pl.BlockSpec((tk, outdim), lambda i, k: (k, 0)),
                pl.BlockSpec((1, outdim), lambda i, k: (0, 0)),
            ],
            out_specs=pl.BlockSpec((tm, outdim), lambda i, k: (i, 0)),
            scratch_shapes=scratch_shapes,
        ),
        compiler_params=pltpu.CompilerParams(
            dimension_semantics=("parallel", "arbitrary"),
            vmem_limit_bytes=int(vmem_limit),
        ),
        cost_estimate=pl.CostEstimate(
            flops=flops, transcendentals=0, bytes_accessed=bytes_accessed),
    )(x2d, w1_t, b1_2d, w2_t, b2_2d)

    return out.reshape(*orig_shape[:-1], outdim)


def init_params(key, hidden_dim, outdim):
    """Deterministic init mimicking torch.nn.Linear defaults (uniform bounds)."""
    k1, k2, k3, k4 = jax.random.split(key, 4)
    bound1 = 1.0 / math.sqrt(hidden_dim)
    bound2 = 1.0 / math.sqrt(hidden_dim * 2)
    # Stored as (in, out) == transposed torch weights.
    w1_t = jax.random.uniform(k1, (hidden_dim, hidden_dim * 2),
                              jnp.float32, -bound1, bound1)
    b1 = jax.random.uniform(k2, (hidden_dim * 2,), jnp.float32, -bound1, bound1)
    w2_t = jax.random.uniform(k3, (hidden_dim * 2, outdim),
                              jnp.float32, -bound2, bound2)
    b2 = jax.random.uniform(k4, (outdim,), jnp.float32, -bound2, bound2)
    return w1_t, b1, w2_t, b2


if __name__ == "__main__":
    batch, seq, hidden_dim, outdim = 2, 8, 32, 32

    key = jax.random.PRNGKey(0)
    kx, kp = jax.random.split(key)
    x = jax.random.normal(kx, (batch, seq, hidden_dim), jnp.float32)
    w1_t, b1, w2_t, b2 = init_params(kp, hidden_dim, outdim)

    # Pure-JAX reference (eval-mode dropout = identity).
    ref = jnp.maximum(x @ w1_t + b1, 0.0) @ w2_t + b2

    # 1) f32 compute path (in-place output accumulation): tight match.
    p32 = prepare_ffn_params(w1_t, b1, w2_t, b2, compute_dtype=jnp.float32)
    y32 = jax.block_until_ready(position_wise_ffn(x, *p32))
    assert y32.shape == (batch, seq, outdim)
    assert jnp.allclose(y32, ref, atol=1e-4, rtol=1e-4)

    # 2) bf16 weights prepared once (deployment path), f32 activations/output.
    pbf = prepare_ffn_params(w1_t, b1, w2_t, b2, compute_dtype=jnp.bfloat16)
    y16 = jax.block_until_ready(position_wise_ffn(x, *pbf))
    assert y16.dtype == x.dtype
    assert jnp.allclose(y16.astype(jnp.float32), ref, atol=5e-2, rtol=5e-2)

    # 3) bf16 activations exercise the scratch-accumulator (bf16 output) path.
    y16a = jax.block_until_ready(
        position_wise_ffn(x.astype(jnp.bfloat16), *pbf))
    assert y16a.dtype == jnp.bfloat16
    assert jnp.allclose(y16a.astype(jnp.float32), ref, atol=1e-1, rtol=1e-1)

    # 4) ragged M (M=10) exercises the partial-last-block path (no padding).
    x_odd = jax.random.normal(kx, (batch, 5, hidden_dim), jnp.float32)
    ref_odd = jnp.maximum(x_odd @ w1_t + b1, 0.0) @ w2_t + b2
    y_odd = jax.block_until_ready(position_wise_ffn(x_odd, *pbf))
    assert y_odd.shape == (batch, 5, outdim)
    assert jnp.allclose(y_odd.astype(jnp.float32), ref_odd, atol=5e-2, rtol=5e-2)

    print("KERNEL_OK")
</pallas_src>

<mosaic_0001>
module attributes {stable_mosaic.version = 11 : i64} {
  func.func @ffn_kernel_inplace(%arg0: i32, %arg1: i32, %arg2: memref<8x32xf32, #tpu.memory_space<vmem>>, %arg3: memref<32x64xf32, #tpu.memory_space<vmem>>, %arg4: memref<1x64xf32, #tpu.memory_space<vmem>>, %arg5: memref<64x32xf32, #tpu.memory_space<vmem>>, %arg6: memref<1x32xf32, #tpu.memory_space<vmem>>, %arg7: memref<8x32xf32, #tpu.memory_space<vmem>>) attributes {dimension_semantics = [#tpu.dimension_semantics<parallel>, #tpu.dimension_semantics<arbitrary>], iteration_bounds = array<i64: 2, 1>, scalar_prefetch = 0 : i64, scratch_operands = 0 : i64, tpu.core_type = #tpu.core_type<tc>, window_params = [{transform_indices = @transform_0, window_bounds = array<i64: 8, 32>}, {transform_indices = @transform_1, window_bounds = array<i64: 32, 64>}, {transform_indices = @transform_2, window_bounds = array<i64: 1, 64>}, {transform_indices = @transform_3, window_bounds = array<i64: 64, 32>}, {pipeline_mode = #tpu.pipeline_mode<synchronous>, transform_indices = @transform_4, window_bounds = array<i64: 1, 32>}, {transform_indices = @transform_5, window_bounds = array<i64: 8, 32>}]} {
    %c0_i32 = arith.constant 0 : i32
    %0 = arith.cmpi eq, %arg1, %c0_i32 : i32
    %1 = arith.extui %0 : i1 to i32
    %c0_i32_0 = arith.constant 0 : i32
    %2 = arith.cmpi ne, %1, %c0_i32_0 : i32
    scf.if %2 {
      %c0_14 = arith.constant 0 : index
      %c0_15 = arith.constant 0 : index
      %16 = vector.load %arg6[%c0_14, %c0_15] : memref<1x32xf32, #tpu.memory_space<vmem>>, vector<1x32xf32>
      %17 = vector.shape_cast %16 : vector<1x32xf32> to vector<1x32xf32>
      %18 = vector.broadcast %17 : vector<1x32xf32> to vector<8x32xf32>
      %c0_16 = arith.constant 0 : index
      %c0_17 = arith.constant 0 : index
      %19 = vector.load %arg7[%c0_16, %c0_17] : memref<8x32xf32, #tpu.memory_space<vmem>>, vector<8x32xf32>
      tpu.vector_store %arg7[%c0_16, %c0_17], %18 {strides = array<i32>} : memref<8x32xf32, #tpu.memory_space<vmem>>, vector<8x32xf32>,
    } else {
    }
    %c0 = arith.constant 0 : index
    %c0_1 = arith.constant 0 : index
    %3 = vector.load %arg2[%c0, %c0_1] : memref<8x32xf32, #tpu.memory_space<vmem>>, vector<8x32xf32>
    %c0_2 = arith.constant 0 : index
    %c0_3 = arith.constant 0 : index
    %4 = vector.load %arg3[%c0_2, %c0_3] : memref<32x64xf32, #tpu.memory_space<vmem>>, vector<32x64xf32>
    %cst = arith.constant dense<0.000000e+00> : vector<8x64xf32>
    %5 = tpu.matmul %3, %4, %cst {dimension_numbers = #tpu.dot_dimension_numbers<[1], [0], [0], [1], [0, 0, 1, 1], [], []>} : vector<8x32xf32>, vector<32x64xf32>, vector<8x64xf32> -> vector<8x64xf32>
    %c0_4 = arith.constant 0 : index
    %c0_5 = arith.constant 0 : index
    %6 = vector.load %arg4[%c0_4, %c0_5] : memref<1x64xf32, #tpu.memory_space<vmem>>, vector<1x64xf32>
    %7 = vector.broadcast %6 : vector<1x64xf32> to vector<8x64xf32>
    %8 = arith.addf %5, %7 : vector<8x64xf32>
    %cst_6 = arith.constant 0.000000e+00 : f32
    %9 = vector.broadcast %cst_6 : f32 to vector<8x64xf32>
    %10 = arith.maximumf %8, %9 : vector<8x64xf32>
    %c0_7 = arith.constant 0 : index
    %c0_8 = arith.constant 0 : index
    %11 = vector.load %arg7[%c0_7, %c0_8] : memref<8x32xf32, #tpu.memory_space<vmem>>, vector<8x32xf32>
    %c0_9 = arith.constant 0 : index
    %c0_10 = arith.constant 0 : index
    %12 = vector.load %arg5[%c0_9, %c0_10] : memref<64x32xf32, #tpu.memory_space<vmem>>, vector<64x32xf32>
    %cst_11 = arith.constant dense<0.000000e+00> : vector<8x32xf32>
    %13 = tpu.matmul %10, %12, %cst_11 {dimension_numbers = #tpu.dot_dimension_numbers<[1], [0], [0], [1], [0, 0, 1, 1], [], []>} : vector<8x64xf32>, vector<64x32xf32>, vector<8x32xf32> -> vector<8x32xf32>
    %14 = arith.addf %11, %13 : vector<8x32xf32>
    %c0_12 = arith.constant 0 : index
    %c0_13 = arith.constant 0 : index
    %15 = vector.load %arg7[%c0_12, %c0_13] : memref<8x32xf32, #tpu.memory_space<vmem>>, vector<8x32xf32>
    tpu.vector_store %arg7[%c0_12, %c0_13], %14 {strides = array<i32>} : memref<8x32xf32, #tpu.memory_space<vmem>>, vector<8x32xf32>,
    return
  }
  func.func @transform_0(%arg0: i32, %arg1: i32) -> (i32, i32) {
    %c0_i32 = arith.constant 0 : i32
    %c0_i32_0 = arith.constant 0 : i32
    return %arg0, %c0_i32 : i32, i32
  }
  func.func @transform_1(%arg0: i32, %arg1: i32) -> (i32, i32) {
    %c0_i32 = arith.constant 0 : i32
    %c0_i32_0 = arith.constant 0 : i32
    return %c0_i32, %arg1 : i32, i32
  }
  func.func @transform_2(%arg0: i32, %arg1: i32) -> (i32, i32) {
    %c0_i32 = arith.constant 0 : i32
    %c0_i32_0 = arith.constant 0 : i32
    return %c0_i32, %arg1 : i32, i32
  }
  func.func @transform_3(%arg0: i32, %arg1: i32) -> (i32, i32) {
    %c0_i32 = arith.constant 0 : i32
    %c0_i32_0 = arith.constant 0 : i32
    return %arg1, %c0_i32 : i32, i32
  }
  func.func @transform_4(%arg0: i32, %arg1: i32) -> (i32, i32) {
    %c0_i32 = arith.constant 0 : i32
    %c0_i32_0 = arith.constant 0 : i32
    %c0_i32_1 = arith.constant 0 : i32
    return %c0_i32, %c0_i32_0 : i32, i32
  }
  func.func @transform_5(%arg0: i32, %arg1: i32) -> (i32, i32) {
    %c0_i32 = arith.constant 0 : i32
    %c0_i32_0 = arith.constant 0 : i32
    return %arg0, %c0_i32 : i32, i32
  }
}

</mosaic_0001>

<llo_original>
// kernel: tpu_custom_call.1
$region0: #{tpu_custom_call.1}
  #allocation0 [shape = 'u32[]', space=smem, size = 0x4, offset = 0x4, fixed_abs, tag = 'smem constant byte address 0x4 - core index']
  #allocation1 [shape = 'u32[144,128]{1,0:T(1,128)}', space=vmem, size = 0x12000, scoped, tag = 'internal scratch']
  %s0 = inlined_call_operand.vmem [shape: f32[16,32], index: 0, kind: input, shape index: {}]
  %s1 = inlined_call_operand.vmem [shape: f32[32,64], index: 1, kind: input, shape index: {}]
  %s2 = inlined_call_operand.vmem [shape: f32[1,64], index: 2, kind: input, shape index: {}]
  %s3 = inlined_call_operand.vmem [shape: f32[64,32], index: 3, kind: input, shape index: {}]
  %s4 = inlined_call_operand.vmem [shape: f32[1,32], index: 4, kind: input, shape index: {}]
  %s5 = inlined_call_operand.hbm [shape: f32[16,32], index: 5, kind: output, shape index: {}]
  %s6 = sld [smem:[#allocation0]]
  $region57: #{tpu_custom_call.1} parent=0
    _
  %s8 = ssub.s32 1, %s6
  %s9 = scalar_select 0, %s8, %s6
  $region1: #{tpu_custom_call.1} parent=0
    #allocation2 [shape = 'u8[8192]{0}', space=vmem, size = 0x2000, scoped, tag = 'output window, operand 0']
    #allocation3 [shape = 's32[2]{0}', space=sflag, size = 0x8, scoped, tag = 'scoped memory for tpu_custom_call.1']
    %10 = vsyncpa [#allocation3], 0
    %s11 = scalar_lea.sflag [#allocation3], 1
    %12 = vsyncpa %s11, 0
    loop: start=0, step=1, limit=4
    $region2: #{tpu_custom_call.1} parent=1 // loop_pre_header
      _
    $region3: #{tpu_custom_call.1} parent=1 // loop_header
      %s14 = sphi 0, %s18
      %p15 = scmp.ge.s32.totalorder %s14, 4
      %s21 = sphi 0, %s33
      %s22 = sphi 0, %s29
      %s23 = sphi 0, %s21
      %s24 = sphi 0, %s22
      %s25 = sphi 0, %s23
      %s26 = sphi 0, %s24
      %s36 = sphi 0, %s38
      %s39 = sphi 0, %s36
      %s40 = sphi 0, %s39
      %s56 = sphi 0, %s40
      %s62 = sphi 0, %s64
      %s65 = sphi 0, %s62
      %s66 = sphi 0, %s65
      %s82 = sphi 0, %s66
      %s88 = sphi 0, %s90
      %s91 = sphi 0, %s88
      %s92 = sphi 0, %s91
      %s108 = sphi 0, %s92
      %s114 = sphi 0, %s116
      %s117 = sphi 0, %s114
      %s118 = sphi 0, %s117
      %s134 = sphi 0, %s118
      %s138 = sphi 0, %s138
      %s140 = sphi 0, %s138
      %s141 = sphi 0, %s140
      %s155 = sphi 0, %s141
      %s161 = sphi 0, %s163
      %s164 = sphi 0, %s161
      %s165 = sphi 0, %s164
      %s181 = sphi 0, %s165
    $region4: #{tpu_custom_call.1} parent=1 // loop_header_branch
      %17 = sbr.rel (%p15) target = $region8
    $region5: #{tpu_custom_call.1} parent=1 // loop_body
      %s19 = ssub.s32 %s14, 1
      %s20 = ssub.s32 %s14, 2
      %s27 = sadd.s32 1, %s22
      %p28 = scmp.ge.s32.totalorder %s27, 1
      %s29 = scalar_select %p28, 0, %s27
      %s30 = sadd.s32 1, %s21
      %s31 = scalar_select %p28, %s30, %s21
      %p32 = scmp.ge.s32.totalorder %s31, 2
      %s33 = scalar_select %p32, 0, %s31
      %s34 = ssub.s32 %s21, %s33
      %p35 = scmp.eq.s32.totalorder %s34, 0
      %s37 = sadd.s32 %s36, 1
      %s38 = scalar_select %p35, %s36, %s37
      %p41 = pneg %p35
      %p42 = scmp.eq.s32.totalorder %s14, 1
      %p43 = por %p41, %p42
      %p44 = scmp.ne.s32.totalorder %s36, %s39
      %p45 = scmp.eq.s32.totalorder %s14, 0
      %p46 = por %p44, %p45
      %p47 = scmp.ne.s32.totalorder %s36, %s39
      %p48 = scmp.eq.s32.totalorder %s19, 1
      %p49 = por %p47, %p48
      %p50 = scmp.ne.s32.totalorder %s39, %s40
      %p51 = scmp.eq.s32.totalorder %s19, 0
      %p52 = por %p50, %p51
      %p53 = scmp.ne.s32.totalorder %s39, %s40
      %p54 = scmp.eq.s32.totalorder %s20, 1
      %p55 = por %p53, %p54
      %p57 = scmp.ne.s32.totalorder %s40, %s56
      %p58 = scmp.eq.s32.totalorder %s20, 0
      %p59 = por %p57, %p58
      %s60 = ssub.s32 %s22, %s29
      %p61 = scmp.eq.s32.totalorder %s60, 0
      %s63 = sadd.s32 %s62, 1
      %s64 = scalar_select %p61, %s62, %s63
      %p67 = pneg %p61
      %p68 = scmp.eq.s32.totalorder %s14, 1
      %p69 = por %p67, %p68
      %p70 = scmp.ne.s32.totalorder %s62, %s65
      %p71 = scmp.eq.s32.totalorder %s14, 0
      %p72 = por %p70, %p71
      %p73 = scmp.ne.s32.totalorder %s62, %s65
      %p74 = scmp.eq.s32.totalorder %s19, 1
      %p75 = por %p73, %p74
      %p76 = scmp.ne.s32.totalorder %s65, %s66
      %p77 = scmp.eq.s32.totalorder %s19, 0
      %p78 = por %p76, %p77
      %p79 = scmp.ne.s32.totalorder %s65, %s66
      %p80 = scmp.eq.s32.totalorder %s20, 1
      %p81 = por %p79, %p80
      %p83 = scmp.ne.s32.totalorder %s66, %s82
      %p84 = scmp.eq.s32.totalorder %s20, 0
      %p85 = por %p83, %p84
      %s86 = ssub.s32 %s22, %s29
      %p87 = scmp.eq.s32.totalorder %s86, 0
      %s89 = sadd.s32 %s88, 1
      %s90 = scalar_select %p87, %s88, %s89
      %p93 = pneg %p87
      %p94 = scmp.eq.s32.totalorder %s14, 1
      %p95 = por %p93, %p94
      %p96 = scmp.ne.s32.totalorder %s88, %s91
      %p97 = scmp.eq.s32.totalorder %s14, 0
      %p98 = por %p96, %p97
      %p99 = scmp.ne.s32.totalorder %s88, %s91
      %p100 = scmp.eq.s32.totalorder %s19, 1
      %p101 = por %p99, %p100
      %p102 = scmp.ne.s32.totalorder %s91, %s92
      %p103 = scmp.eq.s32.totalorder %s19, 0
      %p104 = por %p102, %p103
      %p105 = scmp.ne.s32.totalorder %s91, %s92
      %p106 = scmp.eq.s32.totalorder %s20, 1
      %p107 = por %p105, %p106
      %p109 = scmp.ne.s32.totalorder %s92, %s108
      %p110 = scmp.eq.s32.totalorder %s20, 0
      %p111 = por %p109, %p110
      %s112 = ssub.s32 %s22, %s29
      %p113 = scmp.eq.s32.totalorder %s112, 0
      %s115 = sadd.s32 %s114, 1
      %s116 = scalar_select %p113, %s114, %s115
      %p119 = pneg %p113
      %p120 = scmp.eq.s32.totalorder %s14, 1
      %p121 = por %p119, %p120
      %p122 = scmp.ne.s32.totalorder %s114, %s117
      %p123 = scmp.eq.s32.totalorder %s14, 0
      %p124 = por %p122, %p123
      %p125 = scmp.ne.s32.totalorder %s114, %s117
      %p126 = scmp.eq.s32.totalorder %s19, 1
      %p127 = por %p125, %p126
      %p128 = scmp.ne.s32.totalorder %s117, %s118
      %p129 = scmp.eq.s32.totalorder %s19, 0
      %p130 = por %p128, %p129
      %p131 = scmp.ne.s32.totalorder %s117, %s118
      %p132 = scmp.eq.s32.totalorder %s20, 1
      %p133 = por %p131, %p132
      %p135 = scmp.ne.s32.totalorder %s118, %s134
      %p136 = scmp.eq.s32.totalorder %s20, 0
      %p137 = por %p135, %p136
      %s139 = sadd.s32 %s138, 1
      %p142 = scmp.eq.s32.totalorder %s14, 1
      %p143 = scmp.ne.s32.totalorder %s138, %s140
      %p144 = scmp.eq.s32.totalorder %s14, 0
      %p145 = por %p143, %p144
      %p146 = scmp.ne.s32.totalorder %s138, %s140
      %p147 = scmp.eq.s32.totalorder %s19, 1
      %p148 = por %p146, %p147
      %p149 = scmp.ne.s32.totalorder %s140, %s141
      %p150 = scmp.eq.s32.totalorder %s19, 0
      %p151 = por %p149, %p150
      %p152 = scmp.ne.s32.totalorder %s140, %s141
      %p153 = scmp.eq.s32.totalorder %s20, 1
      %p154 = por %p152, %p153
      %p156 = scmp.ne.s32.totalorder %s141, %s155
      %p157 = scmp.eq.s32.totalorder %s20, 0
      %p158 = por %p156, %p157
      %s159 = ssub.s32 %s21, %s33
      %p160 = scmp.eq.s32.totalorder %s159, 0
      %s162 = sadd.s32 %s161, 1
      %s163 = scalar_select %p160, %s161, %s162
      %p166 = pneg %p160
      %p167 = scmp.eq.s32.totalorder %s14, 1
      %p168 = por %p166, %p167
      %p169 = scmp.ne.s32.totalorder %s161, %s164
      %p170 = scmp.eq.s32.totalorder %s14, 0
      %p171 = por %p169, %p170
      %p172 = scmp.ne.s32.totalorder %s161, %s164
      %p173 = scmp.eq.s32.totalorder %s19, 1
      %p174 = por %p172, %p173
      %p175 = scmp.ne.s32.totalorder %s164, %s165
      %p176 = scmp.eq.s32.totalorder %s19, 0
      %p177 = por %p175, %p176
      %p178 = scmp.ne.s32.totalorder %s164, %s165
      %p179 = scmp.eq.s32.totalorder %s20, 1
      %p180 = por %p178, %p179
      %p182 = scmp.ne.s32.totalorder %s165, %s181
      %p183 = scmp.eq.s32.totalorder %s20, 0
      %p184 = por %p182, %p183
      %p185 = scmp.le.s32.totalorder 1, %s14
      %p186 = scmp.lt.s32.totalorder %s14, 3
      %p187 = pnand %p185, %p186
      %p188 = pneg %p187
      // Predicated region
      $region9: #{tpu_custom_call.1} parent=5 // pred_check
        _
      $region10: #{tpu_custom_call.1} parent=5 // pred_check_branch
        %190 = sbr.rel (%p187) target = $region12
      $region11: #{tpu_custom_call.1} parent=5 // pred_region
        %s191 = ssub.s32 %s14, 1
        // Predicated region
        $region13: #{tpu_custom_call.1} parent=11 // pred_check
          %p192 = pneg %p78
        $region14: #{tpu_custom_call.1} parent=11 // pred_check_branch
          %194 = sbr.rel (%p192) target = $region16
        $region15: #{tpu_custom_call.1} parent=11 // pred_region
          %p195 = scmp.lt.s32.totalorder %s24, 0
          %s196 = scalar_select %p195, %s24, 0
          %s197 = smul.addr %s196, 8
          %s198 = scalar_lea.vmem %s1, %s197
        $region16: #{tpu_custom_call.1} parent=11 // pred_fallthru
          _
        // Predicated region
        $region17: #{tpu_custom_call.1} parent=11 // pred_check
          %p199 = pneg %p104
        $region18: #{tpu_custom_call.1} parent=11 // pred_check_branch
          %201 = sbr.rel (%p199) target = $region20
        $region19: #{tpu_custom_call.1} parent=11 // pred_region
          %p202 = scmp.lt.s32.totalorder %s24, 0
          %s203 = scalar_select %p202, %s24, 0
          %s204 = scalar_lea.vmem %s2, %s203
        $region20: #{tpu_custom_call.1} parent=11 // pred_fallthru
          _
        // Predicated region
        $region21: #{tpu_custom_call.1} parent=11 // pred_check
          %p205 = pneg %p130
        $region22: #{tpu_custom_call.1} parent=11 // pred_check_branch
          %207 = sbr.rel (%p205) target = $region24
        $region23: #{tpu_custom_call.1} parent=11 // pred_region
          %s208 = smul.u32 8, %s24
          %p209 = scmp.lt.s32.totalorder %s208, 7
          %s210 = scalar_select %p209, %s208, 7
          %s211 = smul.addr %s210, 8
          %s212 = scalar_lea.vmem %s3, %s211
          %s213 = smul.u32 8, %s24
        $region24: #{tpu_custom_call.1} parent=11 // pred_fallthru
          _
        // Predicated region
        $region25: #{tpu_custom_call.1} parent=11 // pred_check
          %p214 = pneg %p151
        $region26: #{tpu_custom_call.1} parent=11 // pred_check_branch
          %216 = sbr.rel (%p214) target = $region28
        $region27: #{tpu_custom_call.1} parent=11 // pred_region
          _
        $region28: #{tpu_custom_call.1} parent=11 // pred_fallthru
          _
      $region12: #{tpu_custom_call.1} parent=5 // pred_fallthru
        _
      %p217 = scmp.lt.s32.totalorder %s14, 2
      // Predicated region
      $region29: #{tpu_custom_call.1} parent=5 // pred_check
        %p218 = pneg %p217
      $region30: #{tpu_custom_call.1} parent=5 // pred_check_branch
        %220 = sbr.rel (%p218) target = $region32
      $region31: #{tpu_custom_call.1} parent=5 // pred_region
        // Predicated region
        $region33: #{tpu_custom_call.1} parent=31 // pred_check
          %p221 = pneg %p46
        $region34: #{tpu_custom_call.1} parent=31 // pred_check_branch
          %223 = sbr.rel (%p221) target = $region36
        $region35: #{tpu_custom_call.1} parent=31 // pred_region
          %p224 = scmp.lt.s32.totalorder %s21, 1
          %s225 = scalar_select %p224, %s21, 1
          %s226 = smul.addr %s225, 8
          %s227 = scalar_lea.vmem %s0, %s226
        $region36: #{tpu_custom_call.1} parent=31 // pred_fallthru
          _
      $region32: #{tpu_custom_call.1} parent=5 // pred_fallthru
        _
      %p228 = scmp.le.s32.totalorder 1, %s14
      %p229 = scmp.lt.s32.totalorder %s14, 3
      %p230 = pnand %p228, %p229
      %p231 = pneg %p230
      // Predicated region
      $region37: #{tpu_custom_call.1} parent=5 // pred_check
        _
      $region38: #{tpu_custom_call.1} parent=5 // pred_check_branch
        %233 = sbr.rel (%p230) target = $region40
      $region39: #{tpu_custom_call.1} parent=5 // pred_region
        %s234 = ssub.s32 %s14, 1
        %p235 = scmp.lt.s32.totalorder %s23, 1
        %s236 = scalar_select %p235, %s23, 1
        %s237 = smul.addr %s236, 8
        %s238 = scalar_lea.vmem %s0, %s237
        %p239 = pneg %p52
        %p240 = pneg %p49
        %p241 = scmp.lt.s32.totalorder %s24, 0
        %s242 = scalar_select %p241, %s24, 0
        %s243 = smul.addr %s242, 8
        %s244 = scalar_lea.vmem %s1, %s243
        %p245 = pneg %p78
        %p246 = pneg %p75
        %p247 = scmp.lt.s32.totalorder %s24, 0
        %s248 = scalar_select %p247, %s24, 0
        %s249 = scalar_lea.vmem %s2, %s248
        %p250 = pneg %p104
        %p251 = pneg %p101
        %s252 = smul.u32 8, %s24
        %p253 = scmp.lt.s32.totalorder %s252, 7
        %s254 = scalar_select %p253, %s252, 7
        %s255 = smul.addr %s254, 8
        %s256 = scalar_lea.vmem %s3, %s255
        %p257 = pneg %p130
        %p258 = pneg %p127
        %p259 = pneg %p151
        %p260 = pneg %p148
        %p261 = pneg %p177
        %p262 = pneg %p174
        %s263 = sand.u32 %s164, 1
        %s264 = scalar_lea.sflag [#allocation3], %s263
        %s265 = sand.u32 %s164, 1
        %s266 = smul.addr %s265, 8
        %s267 = scalar_lea.vmem [#allocation2], %s266
        %p268 = scmp.lt.s32.totalorder %s23, 1
        %s269 = scalar_select %p268, %s23, 1
        %s270 = smul.addr %s269, 8
        %s271 = scalar_lea.vmem %s0, %s270
        %p272 = scmp.lt.s32.totalorder %s24, 0
        %s273 = scalar_select %p272, %s24, 0
        %s274 = smul.addr %s273, 8
        %s275 = scalar_lea.vmem %s1, %s274
        %p276 = scmp.lt.s32.totalorder %s24, 0
        %s277 = scalar_select %p276, %s24, 0
        %s278 = scalar_lea.vmem %s2, %s277
        %s279 = smul.u32 8, %s24
        %p280 = scmp.lt.s32.totalorder %s279, 7
        %s281 = scalar_select %p280, %s279, 7
        %s282 = smul.addr %s281, 8
        %s283 = scalar_lea.vmem %s3, %s282
        %s284 = smul.u32 8, %s24
        %p285 = scmp.eq.s32.totalorder %s24, 0
        // Predicated region
        $region41: #{tpu_custom_call.1} parent=39 // pred_check
          %p286 = pneg %p285
        $region42: #{tpu_custom_call.1} parent=39 // pred_check_branch
          %288 = sbr.rel (%p286) target = $region44
        $region43: #{tpu_custom_call.1} parent=39 // pred_region
          %v289 = vld [vmem:[%s4] sm:$0x1]
          %v291 = vlaneseq
          %v292 = vshrl.u32 %v291, 7
          %v293 = vsub.s32 0, %v292
          %v294 = vrot.slane %v289, %v293
          %vm296 = vcmask 261120
          %297 = vst.msk [vmem:[%s267] sm:$0xff] %vm296, %v294
        $region44: #{tpu_custom_call.1} parent=39 // pred_fallthru
          _
        %v298 = vld [vmem:[%s271] sm:$0xff]
        %v299 = vld [vmem:[%s275] sm:$0xff]
        %v300 = vld [vmem:[%s275 + $0x8] sm:$0xff]
        %v301 = vld [vmem:[%s275 + $0x10] sm:$0xff]
        %v302 = vld [vmem:[%s275 + $0x18] sm:$0xff]
        %v303 = vld [vmem:[%s278] sm:$0x1]
        %v305 = vlaneseq
        %v306 = vshrl.u32 %v305, 7
        %v307 = vsub.s32 0, %v306
        %v308 = vrot.slane %v303, %v307
        %vm310 = vcmask 261120
        %v312 = vsel %vm310, %v298, 0
        %314 = vmatprep.subr.mxu0 0.0
        %315 = vmatpush1.msra.mxu0 %v299
        %316 = vmatprep.subr.mxu0 0.0
        %317 = vmatpush1.msra.mxu0 %v300
        %318 = vmatprep.subr.mxu0 0.0
        %319 = vmatpush1.msra.mxu0 %v301
        %320 = vmatprep.subr.mxu0 0.0
        %321 = vmatpush1.msra.mxu0 %v302
        %322 = vmatprep.subr.mxu0 0.0
        %323 = vmatpush1.msra.mxu0 0.0
        %324 = vmatprep.subr.mxu0 0.0
        %325 = vmatpush1.msra.mxu0 0.0
        %326 = vmatprep.subr.mxu0 0.0
        %327 = vmatpush1.msra.mxu0 0.0
        %328 = vmatprep.subr.mxu0 0.0
        %329 = vmatpush1.msra.mxu0 0.0
        %330 = vmatprep.subr.mxu0 0.0
        %331 = vmatpush1.msra.mxu0 0.0
        %332 = vmatprep.subr.mxu0 0.0
        %333 = vmatpush1.msra.mxu0 0.0
        %334 = vmatprep.subr.mxu0 0.0
        %335 = vmatpush1.msra.mxu0 0.0
        %336 = vmatprep.subr.mxu0 0.0
        %337 = vmatpush1.msra.mxu0 0.0
        %338 = vmatprep.subr.mxu0 0.0
        %339 = vmatpush1.msra.mxu0 0.0
        %340 = vmatprep.subr.mxu0 0.0
        %341 = vmatpush1.msra.mxu0 0.0
        %342 = vmatprep.subr.mxu0 0.0
        %343 = vmatpush1.msra.mxu0 0.0
        %344 = vmatprep.subr.mxu0 0.0
        %345 = vmatpush1.msra.mxu0 0.0
        %346 = vmatprep.subr.mxu0 0.0
        %347 = vmatpush1.msra.mxu0 0.0
        %348 = vmatprep.subr.mxu0 0.0
        %349 = vmatpush1.msra.mxu0 0.0
        %350 = vmatprep.subr.mxu0 0.0
        %351 = vmatpush1.msra.mxu0 0.0
        %352 = vmatprep.subr.mxu0 0.0
        %353 = vmatpush1.msra.mxu0 0.0
        %354 = vmatprep.subr.mxu0 0.0
        %355 = vmatpush1.msra.mxu0 0.0
        %356 = vmatprep.subr.mxu0 0.0
        %357 = vmatpush1.msra.mxu0 0.0
        %358 = vmatprep.subr.mxu0 0.0
        %359 = vmatpush1.msra.mxu0 0.0
        %360 = vmatprep.subr.mxu0 0.0
        %361 = vmatpush1.msra.mxu0 0.0
        %362 = vmatprep.subr.mxu0 0.0
        %363 = vmatpush1.msra.mxu0 0.0
        %364 = vmatprep.subr.mxu0 0.0
        %365 = vmatpush1.msra.mxu0 0.0
        %366 = vmatprep.subr.mxu0 0.0
        %367 = vmatpush1.msra.mxu0 0.0
        %368 = vmatprep.subr.mxu0 0.0
        %369 = vmatpush1.msra.mxu0 0.0
        %370 = vmatprep.subr.mxu0 0.0
        %371 = vmatpush1.msra.mxu0 0.0
        %372 = vmatprep.subr.mxu0 0.0
        %373 = vmatpush1.msra.mxu0 0.0
        %374 = vmatprep.subr.mxu0 0.0
        %375 = vmatpush1.msra.mxu0 0.0
        %376 = vmatprep.subr.mxu0 0.0
        %377 = vmatpush1.msra.mxu0 0.0
        %378 = vmatprep.mubr.f32.mxu0 0.0
        %379 = vmatmul.mubr.f32.gmra.mrb[0].mxu0 %v312
        %v380 = vpop.f32.mrb[0].mxu0
        %v381 = vadd.f32 %v308, %v380
        %v382 = vpop.f32.mrb[0].mxu0
        %383 = vdwg.mxu0
        %v384 = vmax.f32 %v381, 0.0
        %v385 = vld [vmem:[%s267] sm:$0xff]
        %v386 = vld [vmem:[%s283] sm:$0xff]
        %v387 = vld [vmem:[%s283 + $0x8] sm:$0xff]
        %v388 = vld [vmem:[%s283 + $0x10] sm:$0xff]
        %v389 = vld [vmem:[%s283 + $0x18] sm:$0xff]
        %v390 = vld [vmem:[%s283 + $0x20] sm:$0xff]
        %v391 = vld [vmem:[%s283 + $0x28] sm:$0xff]
        %v392 = vld [vmem:[%s283 + $0x30] sm:$0xff]
        %v393 = vld [vmem:[%s283 + $0x38] sm:$0xff]
        %vm394 = vcmask 523264
        %v396 = vsel %vm394, %v384, 0
        %398 = vmatprep.subr.mxu0 0.0
        %399 = vmatpush1.msra.mxu0 %v386
        %400 = vmatprep.subr.mxu0 0.0
        %401 = vmatpush1.msra.mxu0 %v387
        %402 = vmatprep.subr.mxu0 0.0
        %403 = vmatpush1.msra.mxu0 %v388
        %404 = vmatprep.subr.mxu0 0.0
        %405 = vmatpush1.msra.mxu0 %v389
        %406 = vmatprep.subr.mxu0 0.0
        %407 = vmatpush1.msra.mxu0 %v390
        %408 = vmatprep.subr.mxu0 0.0
        %409 = vmatpush1.msra.mxu0 %v391
        %410 = vmatprep.subr.mxu0 0.0
        %411 = vmatpush1.msra.mxu0 %v392
        %412 = vmatprep.subr.mxu0 0.0
        %413 = vmatpush1.msra.mxu0 %v393
        %414 = vmatprep.subr.mxu0 0.0
        %415 = vmatpush1.msra.mxu0 0.0
        %416 = vmatprep.subr.mxu0 0.0
        %417 = vmatpush1.msra.mxu0 0.0
        %418 = vmatprep.subr.mxu0 0.0
        %419 = vmatpush1.msra.mxu0 0.0
        %420 = vmatprep.subr.mxu0 0.0
        %421 = vmatpush1.msra.mxu0 0.0
        %422 = vmatprep.subr.mxu0 0.0
        %423 = vmatpush1.msra.mxu0 0.0
        %424 = vmatprep.subr.mxu0 0.0
        %425 = vmatpush1.msra.mxu0 0.0
        %426 = vmatprep.subr.mxu0 0.0
        %427 = vmatpush1.msra.mxu0 0.0
        %428 = vmatprep.subr.mxu0 0.0
        %429 = vmatpush1.msra.mxu0 0.0
        %430 = vmatprep.subr.mxu0 0.0
        %431 = vmatpush1.msra.mxu0 0.0
        %432 = vmatprep.subr.mxu0 0.0
        %433 = vmatpush1.msra.mxu0 0.0
        %434 = vmatprep.subr.mxu0 0.0
        %435 = vmatpush1.msra.mxu0 0.0
        %436 = vmatprep.subr.mxu0 0.0
        %437 = vmatpush1.msra.mxu0 0.0
        %438 = vmatprep.subr.mxu0 0.0
        %439 = vmatpush1.msra.mxu0 0.0
        %440 = vmatprep.subr.mxu0 0.0
        %441 = vmatpush1.msra.mxu0 0.0
        %442 = vmatprep.subr.mxu0 0.0
        %443 = vmatpush1.msra.mxu0 0.0
        %444 = vmatprep.subr.mxu0 0.0
        %445 = vmatpush1.msra.mxu0 0.0
        %446 = vmatprep.subr.mxu0 0.0
        %447 = vmatpush1.msra.mxu0 0.0
        %448 = vmatprep.subr.mxu0 0.0
        %449 = vmatpush1.msra.mxu0 0.0
        %450 = vmatprep.subr.mxu0 0.0
        %451 = vmatpush1.msra.mxu0 0.0
        %452 = vmatprep.subr.mxu0 0.0
        %453 = vmatpush1.msra.mxu0 0.0
        %454 = vmatprep.subr.mxu0 0.0
        %455 = vmatpush1.msra.mxu0 0.0
        %456 = vmatprep.subr.mxu0 0.0
        %457 = vmatpush1.msra.mxu0 0.0
        %458 = vmatprep.subr.mxu0 0.0
        %459 = vmatpush1.msra.mxu0 0.0
        %460 = vmatprep.subr.mxu0 0.0
        %461 = vmatpush1.msra.mxu0 0.0
        %462 = vmatprep.mubr.f32.mxu0 0.0
        %463 = vmatmul.mubr.f32.gmra.mrb[0].mxu0 %v396
        %v464 = vpop.f32.mrb[0].mxu0
        %v465 = vadd.f32 0.0, %v464
        %v466 = vpop.f32.mrb[0].mxu0
        %467 = vdwg.mxu0
        %v468 = vadd.f32 %v385, %v465
        %469 = vst.msk [vmem:[%s267] sm:$0xff] %vm310, %v468
        %s470 = sand.u32 %s164, 1
        %s471 = scalar_lea.sflag [#allocation3], %s470
        %s472 = sand.u32 %s164, 1
        %s473 = smul.addr %s472, 8
        %s474 = scalar_lea.vmem [#allocation2], %s473
        // Predicated region
        $region45: #{tpu_custom_call.1} parent=39 // pred_check
          %p475 = pneg %p174
        $region46: #{tpu_custom_call.1} parent=39 // pred_check_branch
          %477 = sbr.rel (%p475) target = $region48
        $region47: #{tpu_custom_call.1} parent=39 // pred_region
          %s479 = ssub.s32 128, 128
          %480 = vsyncadd %s471, %s479
          %s481 = smul.addr %s23, 128
          %s482 = scalar_lea.hbm %s5, %s481
          %s484 = sshll.u32 %s474, 4
          %s485 = int_to_ptr.vmem [resolvable:$true] %s484
          %487 = dma.vmem_to_hbm [thread:$0]  %s485, 128, %s482, %s471
        $region48: #{tpu_custom_call.1} parent=39 // pred_fallthru
          _
      $region40: #{tpu_custom_call.1} parent=5 // pred_fallthru
        _
      %p488 = scmp.le.s32.totalorder 2, %s14
      // Predicated region
      $region49: #{tpu_custom_call.1} parent=5 // pred_check
        %p489 = pneg %p488
      $region50: #{tpu_custom_call.1} parent=5 // pred_check_branch
        %491 = sbr.rel (%p489) target = $region52
      $region51: #{tpu_custom_call.1} parent=5 // pred_region
        %s492 = ssub.s32 %s14, 2
        // Predicated region
        $region53: #{tpu_custom_call.1} parent=51 // pred_check
          %p493 = pneg %p180
        $region54: #{tpu_custom_call.1} parent=51 // pred_check_branch
          %495 = sbr.rel (%p493) target = $region56
        $region55: #{tpu_custom_call.1} parent=51 // pred_region
          %s496 = sand.u32 %s165, 1
          %s497 = scalar_lea.sflag [#allocation3], %s496
          %s498 = sand.u32 %s165, 1
          %s499 = smul.addr %s498, 8
          %s500 = scalar_lea.vmem [#allocation2], %s499
          %501 = dma.done %s497, 128
        $region56: #{tpu_custom_call.1} parent=51 // pred_fallthru
          _
      $region52: #{tpu_custom_call.1} parent=5 // pred_fallthru
        _
    $region6: #{tpu_custom_call.1} parent=1 // loop_footer
      %s18 = sadd.s32 1, %s14
    $region7: #{tpu_custom_call.1} parent=1 // loop_footer_branch
      %13 = sbr.rel target = $region3
    $region8: #{tpu_custom_call.1} parent=1 // loop_exit
      _
    %502 = vsyncpa [#allocation3], 1
    %s503 = scalar_lea.sflag [#allocation3], 1
    %504 = vsyncpa %s503, 1

</llo_original>
